<compile_context>
chip_gen: v7x
topology: tpu7x:2x2x1
jax: 0.10.0
libtpu: 0.0.40
codegen_flags: <defaults>
</compile_context>

<pallas_src>
import functools

import jax
import jax.numpy as jnp
from jax import lax
from jax.experimental import pallas as pl
from jax.experimental.pallas import tpu as pltpu

_LANES = 128
_SUBLANES = 8
_MAX_TILE_ROWS = 4096   # (4096,128) f32 block = 2 MiB; 2 inputs x 2 bufs = 8 MiB VMEM
_SMALL_ROWS = 256       # below this, a neutral pad (<=128 KiB copy) is simpler/cheaper
_NUM_PARTS = 2          # leading "parallel" grid axis (2 TensorCores on v7x)


def _round_up(x, m):
    return (x + m - 1) // m * m


def _focal_math(y, t, *, alpha, gamma, hard_targets):
    """Elementwise focal loss in f32; shared by the kernel and the XLA tail."""
    y = y.astype(jnp.float32)
    t = t.astype(jnp.float32)

    if hard_targets:
        # For {0,1} labels the probability of the true class is t*y + (1-t)*(1-y):
        # one log (EUP) instead of two, and no exp at all when alpha is None.
        p_true = t * y + (1.0 - t) * (1.0 - y)
        ce = -jnp.maximum(jnp.log(p_true), -100.0)     # BCE clamps log at -100
        if alpha is not None:
            # NOTE: faithful to the module: weight=alpha is applied *inside* BCE,
            # so pt = exp(-alpha*BCE) (differs from canonical focal alpha-balancing).
            ce = alpha * ce
            pt = jnp.exp(-ce)
        else:
            pt = p_true
    else:
        log_y = jnp.maximum(jnp.log(y), -100.0)
        log_1my = jnp.maximum(jnp.log(1.0 - y), -100.0)
        ce = -(t * log_y + (1.0 - t) * log_1my)
        if alpha is not None:
            ce = alpha * ce
        pt = jnp.exp(-ce)

    w = 1.0 - pt
    g = float(gamma)
    if g.is_integer() and 0.0 <= g <= 8.0:
        gi = int(g)
        wpow = jnp.ones_like(w) if gi == 0 else w
        for _ in range(max(gi - 1, 0)):
            wpow = wpow * w            # repeated VPU multiplies instead of pow (EUP)
    else:
        wpow = jnp.power(w, jnp.float32(g))
    return wpow * ce


def _focal_loss_kernel(y_ref, t_ref, o_ref, *, alpha, gamma, hard_targets,
                       rows, tile_r, tiles_per_part, needs_mask):
    part = pl.program_id(0)
    i = pl.program_id(1)

    @pl.when(i == 0)
    def _init():
        o_ref[...] = jnp.zeros_like(o_ref)

    focal = _focal_math(y_ref[...], t_ref[...],
                        alpha=alpha, gamma=gamma, hard_targets=hard_targets)

    if needs_mask:
        # Only the last real tile is partial (clamped duplicate "overhang" tiles
        # are fully masked); garbage rows may hold NaN but the select drops them.
        tile_idx = part * tiles_per_part + i        # logical (unclamped) tile index
        local_rows = rows - tile_idx * tile_r
        row_ids = lax.broadcasted_iota(jnp.int32, focal.shape, 0)
        focal = jnp.where(row_ids < local_rows, focal, 0.0)

    # Fold sublane groups into the VMEM-resident (8,128) output block (pure VPU
    # adds); the single cross-lane reduce happens once, in the wrapper.
    o_ref[...] += focal.reshape(-1, _SUBLANES, _LANES).sum(axis=0)


def _run_kernel(y2, t2, *, alpha, gamma, hard_targets, rows, tile_r,
                num_parts, tiles_per_part, n_tiles, needs_mask):
    kernel = functools.partial(
        _focal_loss_kernel, alpha=alpha, gamma=gamma, hard_targets=hard_targets,
        rows=rows, tile_r=tile_r, tiles_per_part=tiles_per_part,
        needs_mask=needs_mask)

    if num_parts * tiles_per_part == n_tiles:
        in_idx = lambda c, i: (c * tiles_per_part + i, 0)
    else:
        # Safety net for exotic sizes: clamp so overhanging grid steps never
        # point at a fully out-of-bounds block (their contribution is masked).
        in_idx = lambda c, i: (jnp.minimum(c * tiles_per_part + i, n_tiles - 1), 0)

    partials = pl.pallas_call(
        kernel,
        out_shape=jax.ShapeDtypeStruct((num_parts * _SUBLANES, _LANES), jnp.float32),
        grid_spec=pltpu.PrefetchScalarGridSpec(
            num_scalar_prefetch=0,
            grid=(num_parts, tiles_per_part),
            in_specs=[
                pl.BlockSpec((tile_r, _LANES), in_idx),
                pl.BlockSpec((tile_r, _LANES), in_idx),
            ],
            out_specs=pl.BlockSpec((_SUBLANES, _LANES), lambda c, i: (c, 0)),
        ),
        compiler_params=pltpu.CompilerParams(
            # TODO(synk): on v7x, pltpu.CORE_PARALLEL on the leading axis would
            # guarantee the 2-TensorCore split; "parallel" is the portable choice.
            dimension_semantics=("parallel", "arbitrary"),
            vmem_limit_bytes=32 * 1024 * 1024),
    )(y2, t2)
    return jnp.sum(partials)     # tiny final cross-lane reduce (<= 2048 f32) in XLA


@functools.partial(
    jax.jit, static_argnames=("alpha", "gamma", "reduction", "hard_targets"))
def focal_loss(y_hat, target, *, alpha=None, gamma=2.0, reduction="mean",
               hard_targets=False):
    """Pallas implementation of FocalLoss.forward.

    y_hat:  (N, 1) probabilities (post-sigmoid); f32 or bf16.
    target: (N,) or (N, 1) labels in [0, 1]; float, int or bool.
    hard_targets: set True only if float labels are exactly {0, 1} (saves EUP
        work; silently wrong otherwise).  Auto-enabled for bool/int targets.
    """
    assert y_hat.ndim == 2 and y_hat.shape[1] == 1
    assert target.ndim == 1 or (target.ndim == 2 and target.shape[1] == 1)
    if reduction not in ("mean", "sum"):
        # TODO(synk): reduction='none' (per-element vector output) is not
        # implemented in-kernel; only the reduced variants are supported.
        raise NotImplementedError("only 'mean' and 'sum' reductions supported")

    y = y_hat.reshape(-1)
    t = target.reshape(-1)
    n = y.shape[0]

    hard = (bool(hard_targets) or jnp.issubdtype(t.dtype, jnp.integer)
            or t.dtype == jnp.bool_)
    if t.dtype == jnp.bool_:
        t = t.astype(jnp.int8)       # keep labels narrow on the wire

    alpha_f = None if alpha is None else float(alpha)
    gamma_f = float(gamma)

    rows_ceil = pl.cdiv(n, _LANES)

    if rows_ceil <= _SMALL_ROWS:
        # Tiny input: one neutral-padded tile (pad copies <= 128 KiB, negligible).
        # (y=1, t=1) -> ce = 0 -> focal = 0, so no masking is needed.
        rows = max(_round_up(rows_ceil, 32), 32)
        n_pad = rows * _LANES
        y2 = jnp.pad(y, (0, n_pad - n), constant_values=1).reshape(rows, _LANES)
        t2 = jnp.pad(t, (0, n_pad - n), constant_values=1).reshape(rows, _LANES)
        total = _run_kernel(y2, t2, alpha=alpha_f, gamma=gamma_f, hard_targets=hard,
                            rows=rows, tile_r=rows, num_parts=1, tiles_per_part=1,
                            n_tiles=1, needs_mask=False)
    else:
        # Large input: never materialize a padded slab.  The 128-aligned prefix
        # goes to the kernel via a free contiguous reshape; the <=127-element
        # ragged tail is summed in XLA.
        n_tail = n % _LANES
        rows = (n - n_tail) // _LANES
        n_main = rows * _LANES
        if n_tail:
            # TODO(synk): when N is not a multiple of 128 this prefix slice costs
            # one extra copy of the bulk (XLA cannot alias a prefix into a custom
            # call); zero-copy would need manual 1-D HBM DMA inside the kernel.
            y_main = lax.slice(y, (0,), (n_main,))
            t_main = lax.slice(t, (0,), (n_main,))
            tail = jnp.sum(_focal_math(y[n_main:], t[n_main:], alpha=alpha_f,
                                       gamma=gamma_f, hard_targets=hard))
        else:
            y_main, t_main = y, t
            tail = jnp.float32(0.0)
        y2 = y_main.reshape(rows, _LANES)
        t2 = t_main.reshape(rows, _LANES)

        # Adaptive tiling: up to _MAX_TILE_ROWS rows per block, balanced over the
        # two "parallel" parts, rounded to 32 rows (packed-dtype minimum tile).
        num_parts = _NUM_PARTS
        tiles_per_part = max(1, pl.cdiv(rows, num_parts * _MAX_TILE_ROWS))
        tile_r = min(_MAX_TILE_ROWS,
                     _round_up(pl.cdiv(rows, num_parts * tiles_per_part), 32))
        n_tiles = pl.cdiv(rows, tile_r)
        needs_mask = (rows % tile_r != 0) or (num_parts * tiles_per_part != n_tiles)

        total = _run_kernel(y2, t2, alpha=alpha_f, gamma=gamma_f, hard_targets=hard,
                            rows=rows, tile_r=tile_r, num_parts=num_parts,
                            tiles_per_part=tiles_per_part, n_tiles=n_tiles,
                            needs_mask=needs_mask) + tail

    if reduction == "mean":
        return total / jnp.float32(n)
    return total


def _focal_loss_ref(y_hat, target, *, alpha=None, gamma=2.0, reduction="mean"):
    y = y_hat.reshape(-1).astype(jnp.float32)
    t = target.reshape(-1).astype(jnp.float32)
    log_y = jnp.maximum(jnp.log(y), -100.0)
    log_1my = jnp.maximum(jnp.log(1.0 - y), -100.0)
    ce = -(t * log_y + (1.0 - t) * log_1my)
    if alpha is not None:
        ce = alpha * ce
    pt = jnp.exp(-ce)
    fl = (1.0 - pt) ** gamma * ce
    return fl.mean() if reduction == "mean" else fl.sum()


if __name__ == "__main__":
    key = jax.random.PRNGKey(0)
    k1, k2, k3, k4, k5, k6 = jax.random.split(key, 6)

    # 1) Small ragged case (single neutral-padded tile), soft float targets.
    n_small = 300
    y_small = jax.nn.sigmoid(jax.random.normal(k1, (n_small, 1), jnp.float32))
    t_small = jax.random.bernoulli(k2, 0.5, (n_small,)).astype(jnp.float32)
    out = jax.block_until_ready(focal_loss(y_small, t_small, gamma=2.0))
    ref = _focal_loss_ref(y_small, t_small, gamma=2.0)
    assert jnp.allclose(out, ref, rtol=1e-5, atol=1e-6), (out, ref)

    # 2) Small case, bool targets (auto hard-label single-log path) + alpha.
    t_small_b = jax.random.bernoulli(k2, 0.5, (n_small, 1))
    out_b = jax.block_until_ready(focal_loss(y_small, t_small_b, alpha=0.25))
    ref_b = _focal_loss_ref(y_small, t_small_b.astype(jnp.float32), alpha=0.25)
    assert jnp.allclose(out_b, ref_b, rtol=1e-5, atol=1e-6), (out_b, ref_b)

    # 3) Large ragged case: 2-part grid, partial-tile masking, XLA tail, sum.
    n_big = 300_001
    y_big = jax.nn.sigmoid(jax.random.normal(k3, (n_big, 1), jnp.float32))
    t_big = jax.random.bernoulli(k4, 0.5, (n_big, 1)).astype(jnp.float32)
    out2 = jax.block_until_ready(
        focal_loss(y_big, t_big, alpha=0.25, gamma=2.0, reduction="sum"))
    ref2 = _focal_loss_ref(y_big, t_big, alpha=0.25, gamma=2.0, reduction="sum")
    assert jnp.allclose(out2, ref2, rtol=5e-4), (out2, ref2)

    # 4) Large aligned case (zero-copy reshape), narrow wire dtypes, hard labels.
    n_al = 1_048_576
    y_al = jax.nn.sigmoid(
        jax.random.normal(k5, (n_al, 1), jnp.float32)).astype(jnp.bfloat16)
    t_al = jax.random.bernoulli(k6, 0.5, (n_al,))
    out3 = jax.block_until_ready(focal_loss(y_al, t_al))
    ref3 = _focal_loss_ref(y_al.astype(jnp.float32), t_al.astype(jnp.float32))
    assert jnp.allclose(out3, ref3, rtol=5e-4), (out3, ref3)

    print("KERNEL_OK")
</pallas_src>

<mosaic_0001>
module attributes {stable_mosaic.version = 11 : i64} {
  func.func @_focal_loss_kernel(%arg0: i32, %arg1: i32, %arg2: memref<32x128xf32, #tpu.memory_space<vmem>>, %arg3: memref<32x128xf32, #tpu.memory_space<vmem>>, %arg4: memref<8x128xf32, #tpu.memory_space<vmem>>) attributes {dimension_semantics = [#tpu.dimension_semantics<parallel>, #tpu.dimension_semantics<arbitrary>], iteration_bounds = array<i64: 1, 1>, scalar_prefetch = 0 : i64, scratch_operands = 0 : i64, tpu.core_type = #tpu.core_type<tc>, window_params = [{transform_indices = @transform_0, window_bounds = array<i64: 32, 128>}, {transform_indices = @transform_1, window_bounds = array<i64: 32, 128>}, {transform_indices = @transform_2, window_bounds = array<i64: 8, 128>}]} {
    %c0_i32 = arith.constant 0 : i32
    %0 = arith.cmpi eq, %arg1, %c0_i32 : i32
    %1 = arith.extui %0 : i1 to i32
    %c0_i32_0 = arith.constant 0 : i32
    %2 = arith.cmpi ne, %1, %c0_i32_0 : i32
    scf.if %2 {
      %cst_15 = arith.constant 0.000000e+00 : f32
      %32 = vector.broadcast %cst_15 : f32 to vector<8x128xf32>
      %c0_16 = arith.constant 0 : index
      %c0_17 = arith.constant 0 : index
      %33 = vector.load %arg4[%c0_16, %c0_17] : memref<8x128xf32, #tpu.memory_space<vmem>>, vector<8x128xf32>
      tpu.vector_store %arg4[%c0_16, %c0_17], %32 {strides = array<i32>} : memref<8x128xf32, #tpu.memory_space<vmem>>, vector<8x128xf32>,
    } else {
    }
    %c0 = arith.constant 0 : index
    %c0_1 = arith.constant 0 : index
    %3 = vector.load %arg2[%c0, %c0_1] : memref<32x128xf32, #tpu.memory_space<vmem>>, vector<32x128xf32>
    %c0_2 = arith.constant 0 : index
    %c0_3 = arith.constant 0 : index
    %4 = vector.load %arg3[%c0_2, %c0_3] : memref<32x128xf32, #tpu.memory_space<vmem>>, vector<32x128xf32>
    %5 = math.log %3 : vector<32x128xf32>
    %cst = arith.constant -1.000000e+02 : f32
    %6 = vector.broadcast %cst : f32 to vector<32x128xf32>
    %7 = arith.maximumf %5, %6 : vector<32x128xf32>
    %cst_4 = arith.constant 1.000000e+00 : f32
    %8 = vector.broadcast %cst_4 : f32 to vector<32x128xf32>
    %9 = arith.subf %8, %3 : vector<32x128xf32>
    %10 = math.log %9 : vector<32x128xf32>
    %cst_5 = arith.constant -1.000000e+02 : f32
    %11 = vector.broadcast %cst_5 : f32 to vector<32x128xf32>
    %12 = arith.maximumf %10, %11 : vector<32x128xf32>
    %13 = arith.mulf %4, %7 : vector<32x128xf32>
    %cst_6 = arith.constant 1.000000e+00 : f32
    %14 = vector.broadcast %cst_6 : f32 to vector<32x128xf32>
    %15 = arith.subf %14, %4 : vector<32x128xf32>
    %16 = arith.mulf %15, %12 : vector<32x128xf32>
    %17 = arith.addf %13, %16 : vector<32x128xf32>
    %cst_7 = arith.constant 0.000000e+00 : f32
    %18 = vector.broadcast %cst_7 : f32 to vector<32x128xf32>
    %19 = arith.subf %18, %17 : vector<32x128xf32>
    %cst_8 = arith.constant 0.000000e+00 : f32
    %20 = vector.broadcast %cst_8 : f32 to vector<32x128xf32>
    %21 = arith.subf %20, %19 : vector<32x128xf32>
    %22 = math.exp %21 : vector<32x128xf32>
    %cst_9 = arith.constant 1.000000e+00 : f32
    %23 = vector.broadcast %cst_9 : f32 to vector<32x128xf32>
    %24 = arith.subf %23, %22 : vector<32x128xf32>
    %25 = arith.mulf %24, %24 : vector<32x128xf32>
    %26 = arith.mulf %25, %19 : vector<32x128xf32>
    %c0_10 = arith.constant 0 : index
    %c0_11 = arith.constant 0 : index
    %27 = vector.load %arg4[%c0_10, %c0_11] : memref<8x128xf32, #tpu.memory_space<vmem>>, vector<8x128xf32>
    %28 = vector.shape_cast %26 : vector<32x128xf32> to vector<4x8x128xf32>
    %cst_12 = arith.constant dense<0.000000e+00> : vector<8x128xf32>
    %29 = vector.multi_reduction <add>, %28, %cst_12 [0] : vector<4x8x128xf32> to vector<8x128xf32>
    %30 = arith.addf %27, %29 : vector<8x128xf32>
    %c0_13 = arith.constant 0 : index
    %c0_14 = arith.constant 0 : index
    %31 = vector.load %arg4[%c0_13, %c0_14] : memref<8x128xf32, #tpu.memory_space<vmem>>, vector<8x128xf32>
    tpu.vector_store %arg4[%c0_13, %c0_14], %30 {strides = array<i32>} : memref<8x128xf32, #tpu.memory_space<vmem>>, vector<8x128xf32>,
    return
  }
  func.func @transform_0(%arg0: i32, %arg1: i32) -> (i32, i32) {
    %c1_i32 = arith.constant 1 : i32
    %0 = arith.muli %arg0, %c1_i32 : i32
    %1 = arith.addi %0, %arg1 : i32
    %c0_i32 = arith.constant 0 : i32
    %c0_i32_0 = arith.constant 0 : i32
    return %1, %c0_i32 : i32, i32
  }
  func.func @transform_1(%arg0: i32, %arg1: i32) -> (i32, i32) {
    %c1_i32 = arith.constant 1 : i32
    %0 = arith.muli %arg0, %c1_i32 : i32
    %1 = arith.addi %0, %arg1 : i32
    %c0_i32 = arith.constant 0 : i32
    %c0_i32_0 = arith.constant 0 : i32
    return %1, %c0_i32 : i32, i32
  }
  func.func @transform_2(%arg0: i32, %arg1: i32) -> (i32, i32) {
    %c0_i32 = arith.constant 0 : i32
    %c0_i32_0 = arith.constant 0 : i32
    return %arg0, %c0_i32 : i32, i32
  }
}

</mosaic_0001>

<llo_original>
// kernel: focal_loss.1
$region0: #{focal_loss.1}
  #allocation0 [shape = 'u32[]', space=smem, size = 0x4, offset = 0x4, fixed_abs, tag = 'smem constant byte address 0x4 - core index']
  #allocation1 [shape = 'u32[144,128]{1,0:T(1,128)}', space=vmem, size = 0x12000, scoped, tag = 'internal scratch']
  %s0 = inlined_call_operand.vmem [shape: f32[32,128], index: 0, kind: input, shape index: {}]
  %s1 = inlined_call_operand.vmem [shape: f32[32,128], index: 1, kind: input, shape index: {}]
  %s2 = inlined_call_operand.vmem [shape: f32[8,128], index: 2, kind: output, shape index: {}]
  %s3 = sld [smem:[#allocation0]]
  $region22: #{focal_loss.1} parent=0
    _
  %s5 = ssub.s32 1, %s3
  %s6 = scalar_select 0, %s5, %s3
  // Predicated region
  $region2: #{focal_loss.1} parent=0 // pred_check
    _
  $region3: #{focal_loss.1} parent=0 // pred_check_branch
    %8 = sbr.rel (0) target = $region5
  $region4: #{focal_loss.1} parent=0 // pred_region
    %s9 = sadd.s32 0, 0
    %s10 = smul.u32 4, %s9
    %p11 = scmp.lt.s32.totalorder %s10, 3
    %s12 = scalar_select %p11, %s10, 3
    %s13 = smul.addr %s12, 8
    %s14 = scalar_lea.vmem %s0, %s13
    %s15 = sadd.s32 0, 0
    %s16 = smul.u32 4, %s15
  $region5: #{focal_loss.1} parent=0 // pred_fallthru
    _
  // Predicated region
  $region6: #{focal_loss.1} parent=0 // pred_check
    _
  $region7: #{focal_loss.1} parent=0 // pred_check_branch
    %18 = sbr.rel (0) target = $region9
  $region8: #{focal_loss.1} parent=0 // pred_region
    %s19 = sadd.s32 0, 0
    %s20 = smul.u32 4, %s19
    %p21 = scmp.lt.s32.totalorder %s20, 3
    %s22 = scalar_select %p21, %s20, 3
    %s23 = smul.addr %s22, 8
    %s24 = scalar_lea.vmem %s1, %s23
    %s25 = sadd.s32 0, 0
    %s26 = smul.u32 4, %s25
  $region9: #{focal_loss.1} parent=0 // pred_fallthru
    _
  %s27 = sadd.s32 0, 0
  %s28 = smul.u32 4, %s27
  %p29 = scmp.lt.s32.totalorder %s28, 3
  %s30 = scalar_select %p29, %s28, 3
  %s31 = smul.addr %s30, 8
  %s32 = scalar_lea.vmem %s0, %s31
  %s33 = sadd.s32 0, 0
  %s34 = smul.u32 4, %s33
  %p35 = scmp.lt.s32.totalorder %s34, 3
  %s36 = scalar_select %p35, %s34, 3
  %s37 = smul.addr %s36, 8
  %s38 = scalar_lea.vmem %s1, %s37
  %s39 = sadd.s32 0, 0
  %s40 = smul.u32 4, %s39
  %p41 = scmp.lt.s32.totalorder %s40, 3
  %s42 = scalar_select %p41, %s40, 3
  %s43 = smul.addr %s42, 8
  %s44 = scalar_lea.vmem %s0, %s43
  %s45 = sadd.s32 0, 0
  %s46 = smul.u32 4, %s45
  %s47 = sadd.s32 0, 0
  %s48 = smul.u32 4, %s47
  %p49 = scmp.lt.s32.totalorder %s48, 3
  %s50 = scalar_select %p49, %s48, 3
  %s51 = smul.addr %s50, 8
  %s52 = scalar_lea.vmem %s1, %s51
  %s53 = sadd.s32 0, 0
  %s54 = smul.u32 4, %s53
  %p55 = scmp.eq.s32.totalorder 0, 0
  // Predicated region
  $region10: #{focal_loss.1} parent=0 // pred_check
    %p56 = pneg %p55
  $region11: #{focal_loss.1} parent=0 // pred_check_branch
    %58 = sbr.rel (%p56) target = $region13
  $region12: #{focal_loss.1} parent=0 // pred_region
    %59 = vst [vmem:[%s2] sm:$0xff] 0.0
  $region13: #{focal_loss.1} parent=0 // pred_fallthru
    _
  %v60 = vld [vmem:[%s44] sm:$0xff]
  %v61 = vld [vmem:[%s44 + $0x8] sm:$0xff]
  %v62 = vld [vmem:[%s44 + $0x10] sm:$0xff]
  %v63 = vld [vmem:[%s44 + $0x18] sm:$0xff]
  %v64 = vld [vmem:[%s52] sm:$0xff]
  %v65 = vld [vmem:[%s52 + $0x8] sm:$0xff]
  %v66 = vld [vmem:[%s52 + $0x10] sm:$0xff]
  %v67 = vld [vmem:[%s52 + $0x18] sm:$0xff]
  %v68 = vlog2.pop %v60
  %v69 = vmul.f32 %v68, 0.6931472
  %v70 = vlog2.pop %v61
  %v71 = vmul.f32 %v70, 0.6931472
  %v72 = vlog2.pop %v62
  %v73 = vmul.f32 %v72, 0.6931472
  %v74 = vlog2.pop %v63
  %v75 = vmul.f32 %v74, 0.6931472
  %v76 = vmax.f32 %v69, -100.0
  %v77 = vmax.f32 %v71, -100.0
  %v78 = vmax.f32 %v73, -100.0
  %v79 = vmax.f32 %v75, -100.0
  %v80 = vsub.f32 1.0, %v60
  %v81 = vsub.f32 1.0, %v61
  %v82 = vsub.f32 1.0, %v62
  %v83 = vsub.f32 1.0, %v63
  %v84 = vlog2.pop %v80
  %v85 = vmul.f32 %v84, 0.6931472
  %v86 = vlog2.pop %v81
  %v87 = vmul.f32 %v86, 0.6931472
  %v88 = vlog2.pop %v82
  %v89 = vmul.f32 %v88, 0.6931472
  %v90 = vlog2.pop %v83
  %v91 = vmul.f32 %v90, 0.6931472
  %v92 = vmax.f32 %v85, -100.0
  %v93 = vmax.f32 %v87, -100.0
  %v94 = vmax.f32 %v89, -100.0
  %v95 = vmax.f32 %v91, -100.0
  %v96 = vmul.f32 %v64, %v76
  %v97 = vmul.f32 %v65, %v77
  %v98 = vmul.f32 %v66, %v78
  %v99 = vmul.f32 %v67, %v79
  %v100 = vsub.f32 1.0, %v64
  %v101 = vsub.f32 1.0, %v65
  %v102 = vsub.f32 1.0, %v66
  %v103 = vsub.f32 1.0, %v67
  %v104 = vmul.f32 %v100, %v92
  %v105 = vmul.f32 %v101, %v93
  %v106 = vmul.f32 %v102, %v94
  %v107 = vmul.f32 %v103, %v95
  %v108 = vadd.f32 %v96, %v104
  %v109 = vadd.f32 %v97, %v105
  %v110 = vadd.f32 %v98, %v106
  %v111 = vadd.f32 %v99, %v107
  %v112 = vsub.f32 0.0, %v108
  %v113 = vsub.f32 0.0, %v109
  %v114 = vsub.f32 0.0, %v110
  %v115 = vsub.f32 0.0, %v111
  %v116 = vsub.f32 0.0, %v112
  %v117 = vsub.f32 0.0, %v113
  %v118 = vsub.f32 0.0, %v114
  %v119 = vsub.f32 0.0, %v115
  %v120 = vmul.f32 %v116, 1.442695
  %v121 = vpow.pop %v120
  %v122 = vmul.f32 %v117, 1.442695
  %v123 = vpow.pop %v122
  %v124 = vmul.f32 %v118, 1.442695
  %v125 = vpow.pop %v124
  %v126 = vmul.f32 %v119, 1.442695
  %v127 = vpow.pop %v126
  %v128 = vsub.f32 1.0, %v121
  %v129 = vsub.f32 1.0, %v123
  %v130 = vsub.f32 1.0, %v125
  %v131 = vsub.f32 1.0, %v127
  %v132 = vmul.f32 %v128, %v128
  %v133 = vmul.f32 %v129, %v129
  %v134 = vmul.f32 %v130, %v130
  %v135 = vmul.f32 %v131, %v131
  %v136 = vmul.f32 %v132, %v112
  %v137 = vmul.f32 %v133, %v113
  %v138 = vmul.f32 %v134, %v114
  %v139 = vmul.f32 %v135, %v115
  %v140 = vld [vmem:[%s2] sm:$0xff]
  %v141 = vadd.f32 %v136, %v137
  %v142 = vadd.f32 %v141, %v138
  %v143 = vadd.f32 %v142, %v139
  %v144 = vadd.f32 %v140, %v143
  %145 = vst [vmem:[%s2] sm:$0xff] %v144
  // Predicated region
  $region14: #{focal_loss.1} parent=0 // pred_check
    _
  $region15: #{focal_loss.1} parent=0 // pred_check_branch
    %147 = sbr.rel (0) target = $region17
  $region16: #{focal_loss.1} parent=0 // pred_region
    _
  $region17: #{focal_loss.1} parent=0 // pred_fallthru
    _
  // Predicated region
  $region18: #{focal_loss.1} parent=0 // pred_check
    _
  $region19: #{focal_loss.1} parent=0 // pred_check_branch
    %149 = sbr.rel (0) target = $region21
  $region20: #{focal_loss.1} parent=0 // pred_region
    _
  $region21: #{focal_loss.1} parent=0 // pred_fallthru
    _

</llo_original>
